<compile_context>
chip_gen: v7x
topology: tpu7x:2x2x1
jax: 0.10.0
libtpu: 0.0.40
codegen_flags: <defaults>
</compile_context>

<pallas_src>
import math

import jax
import jax.numpy as jnp
from jax.experimental import pallas as pl
from jax.experimental.pallas import tpu as pltpu

DIM = 128          # model dim (lane-aligned)
N_HEADS = 8
D_HEAD = DIM // N_HEADS
SEQ = 16
BATCH = 2
LN_EPS = 1e-5


def attention_kernel(x_ref, wqkv_ref, bqkv_ref, wout_ref, bout_ref,
                     maskv_ref, msum_ref, o_ref):
    bb, S, D = x_ref.shape                        # static block shape
    H = N_HEADS
    x = x_ref[...].reshape(bb * S, D)             # fold batch into sublane rows

    # ---- LayerNorm (one-pass variance; affine folded into QKV weights) ----
    mean = jnp.mean(x, axis=-1, keepdims=True)
    var = jnp.mean(x * x, axis=-1, keepdims=True) - mean * mean
    x_ln = (x - mean) * jax.lax.rsqrt(var + LN_EPS)

    # ---- fused [Q|K|V] projection: LN affine + W_q/k/v + MHA in-proj and the
    #      1/sqrt(D_head) scale all folded into one (D,3D) bf16 weight.
    qkv = jnp.dot(x_ln.astype(wqkv_ref.dtype), wqkv_ref[...],
                  preferred_element_type=jnp.float32) + bqkv_ref[...]
    qq = qkv[:, :D].reshape(bb, S, D)             # already scaled
    kk = qkv[:, D:2 * D].reshape(bb, S, D)
    vv = qkv[:, 2 * D:].reshape(bb, S, D)

    # ---- lane-dense block-diagonal attention ----
    # K_bd/V_bd[b, c, d] = kk/vv[b, c % S, d] when c // S == d // D_head else 0,
    # so scores[b, q, c] is the head-(c//S) score against key (c % S): every
    # one of the H*S = 128 lanes is a valid score and every matmul contracts
    # over the full 128 dims (vs 16-deep per-head matmuls + XLU transposes).
    maskv = maskv_ref[...]                        # (H*S, D) block mask, f32
    k_bd = (jnp.concatenate([kk] * H, axis=1) * maskv).astype(jnp.bfloat16)
    v_bd = (jnp.concatenate([vv] * H, axis=1) * maskv).astype(jnp.bfloat16)

    s = jnp.einsum("bqd,bcd->bqc", qq.astype(jnp.bfloat16), k_bd,
                   preferred_element_type=jnp.float32)       # (bb, S, H*S)
    s = s.reshape(bb * S, H * S)
    # Per-row global max is a valid (overflow-safe) shift for every per-head
    # softmax; per-head denominators via a block-diagonal ones matmul.
    s = s - jnp.max(s, axis=-1, keepdims=True)
    p = jnp.exp(s)
    denom = jnp.dot(p, msum_ref[...], preferred_element_type=jnp.float32)
    p = p / denom                                 # exact normalization (f32)

    ctx = jnp.einsum("bqc,bcd->bqd",
                     p.reshape(bb, S, H * S).astype(jnp.bfloat16), v_bd,
                     preferred_element_type=jnp.float32)     # (bb, S, D)
    # ctx columns already match PyTorch's head-concat layout.

    # ---- fused output projection: MHA out-proj composed with W_o ----
    out = jnp.dot(ctx.reshape(bb * S, D).astype(wout_ref.dtype), wout_ref[...],
                  preferred_element_type=jnp.float32) + bout_ref[...]

    # Dropout(p=0.0) is the identity.
    o_ref[...] = out.reshape(bb, S, D).astype(o_ref.dtype)


def _batch_block_size(batch, seq):
    """How many batch elements each grid step processes.

    v5e/v6e have a single TensorCore (grid is a serial loop), so fold the
    whole batch into one step.  v7x has two TensorCores, but splitting the
    batch across them only pays once each core gets enough rows (>= 64) to
    occupy the MXU and amortize duplicated weight DMA + per-step overhead.
    """
    try:
        kind = jax.devices()[0].device_kind.lower()
    except Exception:
        kind = ""
    if "v7" in kind and batch % 2 == 0 and (batch // 2) * seq >= 64:
        return batch // 2
    return batch


def attention_forward(x, kernel_args):
    B, S, D = x.shape
    bb = _batch_block_size(B, S)
    grid = (B // bb,)

    def const_spec(shape):
        # Constant index_map: tile is fetched once and re-used every grid step.
        return pl.BlockSpec(shape, lambda i: (0, 0))

    w_qkv, b_qkv, w_out, b_out, maskv, msum = kernel_args
    x_spec = pl.BlockSpec((bb, S, D), lambda i: (i, 0, 0))
    in_specs = [x_spec,
                const_spec(w_qkv.shape), const_spec(b_qkv.shape),
                const_spec(w_out.shape), const_spec(b_out.shape),
                const_spec(maskv.shape), const_spec(msum.shape)]

    return pl.pallas_call(
        attention_kernel,
        out_shape=jax.ShapeDtypeStruct((B, S, D), x.dtype),
        grid_spec=pltpu.PrefetchScalarGridSpec(
            num_scalar_prefetch=0,
            grid=grid,
            in_specs=in_specs,
            out_specs=x_spec),
        compiler_params=pltpu.CompilerParams(
            dimension_semantics=("parallel",)),
    )(x, *kernel_args)


def init_params(key, dim):
    ks = jax.random.split(key, 10)
    std = 0.02
    p = {
        "gamma": 1.0 + 0.1 * jax.random.normal(ks[0], (1, dim), jnp.float32),
        "beta": 0.1 * jax.random.normal(ks[1], (1, dim), jnp.float32),
        # PyTorch Linear weights stored as (out_features, in_features)
        "wq": std * jax.random.normal(ks[2], (dim, dim), jnp.float32),
        "wk": std * jax.random.normal(ks[3], (dim, dim), jnp.float32),
        "wv": std * jax.random.normal(ks[4], (dim, dim), jnp.float32),
        "wo": std * jax.random.normal(ks[5], (dim, dim), jnp.float32),
        # nn.MultiheadAttention internals
        "in_w": std * jax.random.normal(ks[6], (3 * dim, dim), jnp.float32),
        "in_b": std * jax.random.normal(ks[7], (3 * dim,), jnp.float32),
        "out_w": std * jax.random.normal(ks[8], (dim, dim), jnp.float32),
        "out_b": std * jax.random.normal(ks[9], (dim,), jnp.float32),
    }
    return p


def pack_kernel_args(p, dim, seq):
    """Host-side exact algebraic fusion of the projection chains + masks."""
    wiq, wik, wiv = jnp.split(p["in_w"], 3, axis=0)
    biq, bik, biv = jnp.split(p["in_b"], 3, axis=0)
    scale = 1.0 / math.sqrt(dim // N_HEADS)

    # x @ Wq^T @ Wiq^T == x @ (Wiq @ Wq)^T   (softmax scale folded into Q)
    wq_f = (wiq @ p["wq"]).T * scale
    wk_f = (wik @ p["wk"]).T
    wv_f = (wiv @ p["wv"]).T
    w_qkv = jnp.concatenate([wq_f, wk_f, wv_f], axis=1)              # (D, 3D)
    b_qkv = jnp.concatenate([biq * scale, bik, biv]).reshape(1, 3 * dim)

    # Fold LayerNorm affine into the QKV projection:
    #   (x_hat*gamma + beta) @ W + b == x_hat @ (gamma[:,None]*W) + (beta@W + b)
    w_qkv_f = p["gamma"].reshape(dim, 1) * w_qkv
    b_qkv_f = p["beta"].reshape(1, dim) @ w_qkv + b_qkv

    # a @ Wop^T @ Wo^T + bop @ Wo^T == a @ (Wo @ Wop)^T + bop @ Wo^T
    w_out = (p["wo"] @ p["out_w"]).T                                 # (D, D)
    b_out = (p["out_b"] @ p["wo"].T).reshape(1, dim)

    # Block-diagonal head masks for the lane-dense attention formulation.
    c = jnp.arange(N_HEADS * seq)
    d = jnp.arange(dim)
    maskv = (c[:, None] // seq == d[None, :] // D_HEAD).astype(jnp.float32)
    msum = (c[:, None] // seq == c[None, :] // seq).astype(jnp.float32)

    return (w_qkv_f.astype(jnp.bfloat16), b_qkv_f.astype(jnp.float32),
            w_out.astype(jnp.bfloat16), b_out.astype(jnp.float32),
            maskv, msum)


def reference(x, p):
    """Pure-JAX mirror of the PyTorch forward (eval, self-attention), unfused."""
    mean = x.mean(-1, keepdims=True)
    var = ((x - mean) ** 2).mean(-1, keepdims=True)
    x_ln = (x - mean) / jnp.sqrt(var + LN_EPS) * p["gamma"][0] + p["beta"][0]
    q = x_ln @ p["wq"].T
    k = x_ln @ p["wk"].T
    v = x_ln @ p["wv"].T
    wiq, wik, wiv = jnp.split(p["in_w"], 3, axis=0)
    biq, bik, biv = jnp.split(p["in_b"], 3, axis=0)
    qq = q @ wiq.T + biq
    kk = k @ wik.T + bik
    vv = v @ wiv.T + biv
    B, S, D = x.shape

    def split_heads(t):
        return t.reshape(B, S, N_HEADS, D_HEAD).transpose(0, 2, 1, 3)

    qh, kh, vh = split_heads(qq), split_heads(kk), split_heads(vv)
    s = jnp.einsum("bhqd,bhkd->bhqk", qh, kh) / math.sqrt(D_HEAD)
    a = jax.nn.softmax(s, axis=-1)
    o = jnp.einsum("bhqk,bhkd->bhqd", a, vh).transpose(0, 2, 1, 3).reshape(B, S, D)
    o = o @ p["out_w"].T + p["out_b"]
    return o @ p["wo"].T


if __name__ == "__main__":
    key = jax.random.PRNGKey(0)
    k_x, k_p = jax.random.split(key)
    x = jax.random.normal(k_x, (BATCH, SEQ, DIM), jnp.float32)

    params = init_params(k_p, DIM)
    kernel_args = pack_kernel_args(params, DIM, SEQ)

    out = attention_forward(x, kernel_args)
    out = jax.block_until_ready(out)

    ref = reference(x, params)
    assert out.shape == (BATCH, SEQ, DIM)
    err = jnp.max(jnp.abs(out - ref))
    assert jnp.allclose(out, ref, rtol=2e-3, atol=2e-3), f"max abs err {err}"

    print("KERNEL_OK")
</pallas_src>

<mosaic_0001>
module attributes {stable_mosaic.version = 11 : i64} {
  func.func @attention_kernel(%arg0: i32, %arg1: memref<2x16x128xf32, #tpu.memory_space<vmem>>, %arg2: memref<128x384xbf16, #tpu.memory_space<vmem>>, %arg3: memref<1x384xf32, #tpu.memory_space<vmem>>, %arg4: memref<128x128xbf16, #tpu.memory_space<vmem>>, %arg5: memref<1x128xf32, #tpu.memory_space<vmem>>, %arg6: memref<128x128xf32, #tpu.memory_space<vmem>>, %arg7: memref<128x128xf32, #tpu.memory_space<vmem>>, %arg8: memref<2x16x128xf32, #tpu.memory_space<vmem>>) attributes {dimension_semantics = [#tpu.dimension_semantics<parallel>], iteration_bounds = array<i64: 1>, scalar_prefetch = 0 : i64, scratch_operands = 0 : i64, tpu.core_type = #tpu.core_type<tc>, window_params = [{transform_indices = @transform_0, window_bounds = array<i64: 2, 16, 128>}, {pipeline_mode = #tpu.pipeline_mode<synchronous>, transform_indices = @transform_1, window_bounds = array<i64: 128, 384>}, {pipeline_mode = #tpu.pipeline_mode<synchronous>, transform_indices = @transform_2, window_bounds = array<i64: 1, 384>}, {pipeline_mode = #tpu.pipeline_mode<synchronous>, transform_indices = @transform_3, window_bounds = array<i64: 128, 128>}, {pipeline_mode = #tpu.pipeline_mode<synchronous>, transform_indices = @transform_4, window_bounds = array<i64: 1, 128>}, {pipeline_mode = #tpu.pipeline_mode<synchronous>, transform_indices = @transform_5, window_bounds = array<i64: 128, 128>}, {pipeline_mode = #tpu.pipeline_mode<synchronous>, transform_indices = @transform_6, window_bounds = array<i64: 128, 128>}, {transform_indices = @transform_7, window_bounds = array<i64: 2, 16, 128>}]} {
    %c0 = arith.constant 0 : index
    %c0_0 = arith.constant 0 : index
    %c0_1 = arith.constant 0 : index
    %0 = vector.load %arg1[%c0, %c0_0, %c0_1] : memref<2x16x128xf32, #tpu.memory_space<vmem>>, vector<2x16x128xf32>
    %1 = vector.shape_cast %0 : vector<2x16x128xf32> to vector<32x128xf32>
    %cst = arith.constant dense<0.000000e+00> : vector<32xf32>
    %2 = vector.multi_reduction <add>, %1, %cst [1] : vector<32x128xf32> to vector<32xf32>
    %3 = vector.shape_cast %2 : vector<32xf32> to vector<32x1xf32>
    %cst_2 = arith.constant 1.280000e+02 : f32
    %4 = vector.broadcast %cst_2 : f32 to vector<32x1xf32>
    %5 = arith.divf %3, %4 : vector<32x1xf32>
    %6 = arith.mulf %1, %1 : vector<32x128xf32>
    %cst_3 = arith.constant dense<0.000000e+00> : vector<32xf32>
    %7 = vector.multi_reduction <add>, %6, %cst_3 [1] : vector<32x128xf32> to vector<32xf32>
    %8 = vector.shape_cast %7 : vector<32xf32> to vector<32x1xf32>
    %cst_4 = arith.constant 1.280000e+02 : f32
    %9 = vector.broadcast %cst_4 : f32 to vector<32x1xf32>
    %10 = arith.divf %8, %9 : vector<32x1xf32>
    %11 = arith.mulf %5, %5 : vector<32x1xf32>
    %12 = arith.subf %10, %11 : vector<32x1xf32>
    %13 = vector.broadcast %5 : vector<32x1xf32> to vector<32x128xf32>
    %14 = arith.subf %1, %13 : vector<32x128xf32>
    %cst_5 = arith.constant 9.99999974E-6 : f32
    %15 = vector.broadcast %cst_5 : f32 to vector<32x1xf32>
    %16 = arith.addf %12, %15 : vector<32x1xf32>
    %17 = math.rsqrt %16 : vector<32x1xf32>
    %18 = vector.broadcast %17 : vector<32x1xf32> to vector<32x128xf32>
    %19 = arith.mulf %14, %18 : vector<32x128xf32>
    %20 = arith.truncf %19 : vector<32x128xf32> to vector<32x128xbf16>
    %c0_6 = arith.constant 0 : index
    %c0_7 = arith.constant 0 : index
    %21 = vector.load %arg2[%c0_6, %c0_7] : memref<128x384xbf16, #tpu.memory_space<vmem>>, vector<128x384xbf16>
    %cst_8 = arith.constant dense<0.000000e+00> : vector<32x384xf32>
    %22 = tpu.matmul %20, %21, %cst_8 {dimension_numbers = #tpu.dot_dimension_numbers<[1], [0], [0], [1], [0, 0, 1, 1], [], []>} : vector<32x128xbf16>, vector<128x384xbf16>, vector<32x384xf32> -> vector<32x384xf32>
    %c0_9 = arith.constant 0 : index
    %c0_10 = arith.constant 0 : index
    %23 = vector.load %arg3[%c0_9, %c0_10] : memref<1x384xf32, #tpu.memory_space<vmem>>, vector<1x384xf32>
    %24 = vector.broadcast %23 : vector<1x384xf32> to vector<32x384xf32>
    %25 = arith.addf %22, %24 : vector<32x384xf32>
    %26 = vector.extract_strided_slice %25 {offsets = [0, 0], sizes = [32, 128], strides = [1, 1]} : vector<32x384xf32> to vector<32x128xf32>
    %27 = vector.shape_cast %26 : vector<32x128xf32> to vector<2x16x128xf32>
    %28 = vector.extract_strided_slice %25 {offsets = [0, 128], sizes = [32, 128], strides = [1, 1]} : vector<32x384xf32> to vector<32x128xf32>
    %29 = vector.shape_cast %28 : vector<32x128xf32> to vector<2x16x128xf32>
    %30 = vector.extract_strided_slice %25 {offsets = [0, 256], sizes = [32, 128], strides = [1, 1]} : vector<32x384xf32> to vector<32x128xf32>
    %31 = vector.shape_cast %30 : vector<32x128xf32> to vector<2x16x128xf32>
    %c0_11 = arith.constant 0 : index
    %c0_12 = arith.constant 0 : index
    %32 = vector.load %arg6[%c0_11, %c0_12] : memref<128x128xf32, #tpu.memory_space<vmem>>, vector<128x128xf32>
    %33 = tpu.concatenate %29, %29, %29, %29, %29, %29, %29, %29 in 1 : vector<2x16x128xf32>, vector<2x16x128xf32>, vector<2x16x128xf32>, vector<2x16x128xf32>, vector<2x16x128xf32>, vector<2x16x128xf32>, vector<2x16x128xf32>, vector<2x16x128xf32> -> vector<2x128x128xf32>
    %34 = vector.shape_cast %32 : vector<128x128xf32> to vector<1x128x128xf32>
    %35 = vector.broadcast %34 : vector<1x128x128xf32> to vector<2x128x128xf32>
    %36 = arith.mulf %33, %35 : vector<2x128x128xf32>
    %37 = arith.truncf %36 : vector<2x128x128xf32> to vector<2x128x128xbf16>
    %38 = tpu.concatenate %31, %31, %31, %31, %31, %31, %31, %31 in 1 : vector<2x16x128xf32>, vector<2x16x128xf32>, vector<2x16x128xf32>, vector<2x16x128xf32>, vector<2x16x128xf32>, vector<2x16x128xf32>, vector<2x16x128xf32>, vector<2x16x128xf32> -> vector<2x128x128xf32>
    %39 = vector.shape_cast %32 : vector<128x128xf32> to vector<1x128x128xf32>
    %40 = vector.broadcast %39 : vector<1x128x128xf32> to vector<2x128x128xf32>
    %41 = arith.mulf %38, %40 : vector<2x128x128xf32>
    %42 = arith.truncf %41 : vector<2x128x128xf32> to vector<2x128x128xbf16>
    %43 = arith.truncf %27 : vector<2x16x128xf32> to vector<2x16x128xbf16>
    "tpu.trace_start"() <{level = 10 : i32, message = "bqd,bcd->bqc"}> : () -> ()
    %cst_13 = arith.constant dense<0.000000e+00> : vector<2x16x128xf32>
    %44 = tpu.matmul %43, %37, %cst_13 {dimension_numbers = #tpu.dot_dimension_numbers<[2], [2], [1], [1], [0, 0, 0, 1, 1, 1], [0], [0]>} : vector<2x16x128xbf16>, vector<2x128x128xbf16>, vector<2x16x128xf32> -> vector<2x16x128xf32>
    "tpu.trace_stop"() : () -> ()
    %45 = vector.shape_cast %44 : vector<2x16x128xf32> to vector<32x128xf32>
    %cst_14 = arith.constant dense<0xFF800000> : vector<32xf32>
    %46 = vector.multi_reduction <maximumf>, %45, %cst_14 [1] : vector<32x128xf32> to vector<32xf32>
    %47 = vector.shape_cast %46 : vector<32xf32> to vector<32x1xf32>
    %48 = vector.broadcast %47 : vector<32x1xf32> to vector<32x128xf32>
    %49 = arith.subf %45, %48 : vector<32x128xf32>
    %50 = math.exp %49 : vector<32x128xf32>
    %c0_15 = arith.constant 0 : index
    %c0_16 = arith.constant 0 : index
    %51 = vector.load %arg7[%c0_15, %c0_16] : memref<128x128xf32, #tpu.memory_space<vmem>>, vector<128x128xf32>
    %cst_17 = arith.constant dense<0.000000e+00> : vector<32x128xf32>
    %52 = tpu.matmul %50, %51, %cst_17 {dimension_numbers = #tpu.dot_dimension_numbers<[1], [0], [0], [1], [0, 0, 1, 1], [], []>} : vector<32x128xf32>, vector<128x128xf32>, vector<32x128xf32> -> vector<32x128xf32>
    %53 = arith.divf %50, %52 : vector<32x128xf32>
    %54 = vector.shape_cast %53 : vector<32x128xf32> to vector<2x16x128xf32>
    %55 = arith.truncf %54 : vector<2x16x128xf32> to vector<2x16x128xbf16>
    "tpu.trace_start"() <{level = 10 : i32, message = "bqc,bcd->bqd"}> : () -> ()
    %cst_18 = arith.constant dense<0.000000e+00> : vector<2x16x128xf32>
    %56 = tpu.matmul %55, %42, %cst_18 {dimension_numbers = #tpu.dot_dimension_numbers<[2], [1], [1], [2], [0, 0, 0, 1, 1, 2], [0], [0]>} : vector<2x16x128xbf16>, vector<2x128x128xbf16>, vector<2x16x128xf32> -> vector<2x16x128xf32>
    "tpu.trace_stop"() : () -> ()
    %57 = vector.shape_cast %56 : vector<2x16x128xf32> to vector<32x128xf32>
    %58 = arith.truncf %57 : vector<32x128xf32> to vector<32x128xbf16>
    %c0_19 = arith.constant 0 : index
    %c0_20 = arith.constant 0 : index
    %59 = vector.load %arg4[%c0_19, %c0_20] : memref<128x128xbf16, #tpu.memory_space<vmem>>, vector<128x128xbf16>
    %cst_21 = arith.constant dense<0.000000e+00> : vector<32x128xf32>
    %60 = tpu.matmul %58, %59, %cst_21 {dimension_numbers = #tpu.dot_dimension_numbers<[1], [0], [0], [1], [0, 0, 1, 1], [], []>} : vector<32x128xbf16>, vector<128x128xbf16>, vector<32x128xf32> -> vector<32x128xf32>
    %c0_22 = arith.constant 0 : index
    %c0_23 = arith.constant 0 : index
    %61 = vector.load %arg5[%c0_22, %c0_23] : memref<1x128xf32, #tpu.memory_space<vmem>>, vector<1x128xf32>
    %62 = vector.broadcast %61 : vector<1x128xf32> to vector<32x128xf32>
    %63 = arith.addf %60, %62 : vector<32x128xf32>
    %64 = vector.shape_cast %63 : vector<32x128xf32> to vector<2x16x128xf32>
    %c0_24 = arith.constant 0 : index
    %c0_25 = arith.constant 0 : index
    %c0_26 = arith.constant 0 : index
    %65 = vector.load %arg8[%c0_24, %c0_25, %c0_26] : memref<2x16x128xf32, #tpu.memory_space<vmem>>, vector<2x16x128xf32>
    tpu.vector_store %arg8[%c0_24, %c0_25, %c0_26], %64 {strides = array<i32>} : memref<2x16x128xf32, #tpu.memory_space<vmem>>, vector<2x16x128xf32>,
    return
  }
  func.func @transform_0(%arg0: i32) -> (i32, i32, i32) {
    %c0_i32 = arith.constant 0 : i32
    %c0_i32_0 = arith.constant 0 : i32
    %c0_i32_1 = arith.constant 0 : i32
    return %arg0, %c0_i32, %c0_i32_0 : i32, i32, i32
  }
  func.func @transform_1(%arg0: i32) -> (i32, i32) {
    %c0_i32 = arith.constant 0 : i32
    %c0_i32_0 = arith.constant 0 : i32
    %c0_i32_1 = arith.constant 0 : i32
    return %c0_i32, %c0_i32_0 : i32, i32
  }
  func.func @transform_2(%arg0: i32) -> (i32, i32) {
    %c0_i32 = arith.constant 0 : i32
    %c0_i32_0 = arith.constant 0 : i32
    %c0_i32_1 = arith.constant 0 : i32
    return %c0_i32, %c0_i32_0 : i32, i32
  }
  func.func @transform_3(%arg0: i32) -> (i32, i32) {
    %c0_i32 = arith.constant 0 : i32
    %c0_i32_0 = arith.constant 0 : i32
    %c0_i32_1 = arith.constant 0 : i32
    return %c0_i32, %c0_i32_0 : i32, i32
  }
  func.func @transform_4(%arg0: i32) -> (i32, i32) {
    %c0_i32 = arith.constant 0 : i32
    %c0_i32_0 = arith.constant 0 : i32
    %c0_i32_1 = arith.constant 0 : i32
    return %c0_i32, %c0_i32_0 : i32, i32
  }
  func.func @transform_5(%arg0: i32) -> (i32, i32) {
    %c0_i32 = arith.constant 0 : i32
    %c0_i32_0 = arith.constant 0 : i32
    %c0_i32_1 = arith.constant 0 : i32
    return %c0_i32, %c0_i32_0 : i32, i32
  }
  func.func @transform_6(%arg0: i32) -> (i32, i32) {
    %c0_i32 = arith.constant 0 : i32
    %c0_i32_0 = arith.constant 0 : i32
    %c0_i32_1 = arith.constant 0 : i32
    return %c0_i32, %c0_i32_0 : i32, i32
  }
  func.func @transform_7(%arg0: i32) -> (i32, i32, i32) {
    %c0_i32 = arith.constant 0 : i32
    %c0_i32_0 = arith.constant 0 : i32
    %c0_i32_1 = arith.constant 0 : i32
    return %arg0, %c0_i32, %c0_i32_0 : i32, i32, i32
  }
}

</mosaic_0001>

<llo_original>
// kernel: tpu_custom_call.1
$region0: #{tpu_custom_call.1}
  #allocation0 [shape = 'u32[]', space=smem, size = 0x4, offset = 0x4, fixed_abs, tag = 'smem constant byte address 0x4 - core index']
  #allocation1 [shape = 'u32[144,128]{1,0:T(1,128)}', space=vmem, size = 0x12000, scoped, tag = 'internal scratch']
  %s0 = inlined_call_operand.hbm [shape: f32[2,16,128], index: 0, kind: input, shape index: {}]
  %s1 = inlined_call_operand.hbm [shape: bf16[128,384], index: 1, kind: input, shape index: {}]
  %s2 = inlined_call_operand.vmem [shape: f32[1,384], index: 2, kind: input, shape index: {}]
  %s3 = inlined_call_operand.hbm [shape: bf16[128,128], index: 3, kind: input, shape index: {}]
  %s4 = inlined_call_operand.vmem [shape: f32[1,128], index: 4, kind: input, shape index: {}]
  %s5 = inlined_call_operand.hbm [shape: f32[128,128], index: 5, kind: input, shape index: {}]
  %s6 = inlined_call_operand.hbm [shape: f32[128,128], index: 6, kind: input, shape index: {}]
  %s7 = inlined_call_operand.hbm [shape: f32[2,16,128], index: 7, kind: output, shape index: {}]
  %s8 = sld [smem:[#allocation0]]
  $region58: #{tpu_custom_call.1} parent=0
    _
  %s10 = ssub.s32 1, %s8
  %s11 = scalar_select 0, %s10, %s8
  $region1: #{tpu_custom_call.1} parent=0
    #allocation2 [shape = 'u8[16384]{0}', space=vmem, size = 0x4000, scoped, tag = 'input window, operand 0, single buffered']
    #allocation3 [shape = 's32[1]{0}', space=sflag, size = 0x4, scoped, tag = 'scoped memory for tpu_custom_call.1']
    #allocation4 [shape = 's32[1]{0}', space=sflag, size = 0x4, scoped, tag = 'scoped memory for tpu_custom_call.1']
    #allocation5 [shape = 'u8[98304]{0}', space=vmem, size = 0x18000, scoped, tag = 'input window, operand 1, single buffered']
    #allocation6 [shape = 's32[1]{0}', space=sflag, size = 0x4, scoped, tag = 'scoped memory for tpu_custom_call.1']
    #allocation7 [shape = 'u8[32768]{0}', space=vmem, size = 0x8000, scoped, tag = 'input window, operand 3, single buffered']
    #allocation8 [shape = 'u8[65536]{0}', space=vmem, size = 0x10000, scoped, tag = 'input window, operand 5, single buffered']
    #allocation9 [shape = 's32[1]{0}', space=sflag, size = 0x4, scoped, tag = 'scoped memory for tpu_custom_call.1']
    #allocation10 [shape = 'u8[65536]{0}', space=vmem, size = 0x10000, scoped, tag = 'input window, operand 6, single buffered']
    #allocation11 [shape = 'u8[16384]{0}', space=vmem, size = 0x4000, scoped, tag = 'output window, operand 0, single buffered']
    %12 = vsyncpa [#allocation3], 0
    %13 = vsyncpa [#allocation6], 0
    %14 = vsyncpa [#allocation9], 0
    %15 = vsyncpa [#allocation4], 0
    // Predicated region
    $region2: #{tpu_custom_call.1} parent=1 // pred_check
      _
    $region3: #{tpu_custom_call.1} parent=1 // pred_check_branch
      %17 = sbr.rel (0) target = $region5
    $region4: #{tpu_custom_call.1} parent=1 // pred_region
      %s19 = ssub.s32 512, 512
      %20 = vsyncadd [#allocation3], %s19
      %s21 = sshll.u32 [#allocation2], 4
      %s22 = int_to_ptr.vmem [resolvable:$true] %s21
      %27 = dma.hbm_to_vmem [thread:$0]  %s0, 512, %s22, [#allocation3], 128, 128, 8
    $region5: #{tpu_custom_call.1} parent=1 // pred_fallthru
      _
    // Predicated region
    $region6: #{tpu_custom_call.1} parent=1 // pred_check
      _
    $region7: #{tpu_custom_call.1} parent=1 // pred_check_branch
      %29 = sbr.rel (0) target = $region9
    $region8: #{tpu_custom_call.1} parent=1 // pred_region
      %s31 = ssub.s32 3072, 3072
      %32 = vsyncadd [#allocation6], %s31
      %s33 = sshll.u32 [#allocation5], 4
      %s34 = int_to_ptr.vmem [resolvable:$true] %s33
      %39 = dma.hbm_to_vmem [thread:$0]  %s1, 3072, %s34, [#allocation6], 192, 192, 12
    $region9: #{tpu_custom_call.1} parent=1 // pred_fallthru
      _
    // Predicated region
    $region10: #{tpu_custom_call.1} parent=1 // pred_check
      _
    $region11: #{tpu_custom_call.1} parent=1 // pred_check_branch
      %41 = sbr.rel (0) target = $region13
    $region12: #{tpu_custom_call.1} parent=1 // pred_region
      _
    $region13: #{tpu_custom_call.1} parent=1 // pred_fallthru
      _
    // Predicated region
    $region14: #{tpu_custom_call.1} parent=1 // pred_check
      _
    $region15: #{tpu_custom_call.1} parent=1 // pred_check_branch
      %43 = sbr.rel (0) target = $region17
    $region16: #{tpu_custom_call.1} parent=1 // pred_region
      %s45 = ssub.s32 1024, 1024
      %46 = vsyncadd [#allocation6], %s45
      %s47 = sshll.u32 [#allocation7], 4
      %s48 = int_to_ptr.vmem [resolvable:$true] %s47
      %53 = dma.hbm_to_vmem [thread:$0]  %s3, 1024, %s48, [#allocation6], 64, 64, 4
    $region17: #{tpu_custom_call.1} parent=1 // pred_fallthru
      _
    // Predicated region
    $region18: #{tpu_custom_call.1} parent=1 // pred_check
      _
    $region19: #{tpu_custom_call.1} parent=1 // pred_check_branch
      %55 = sbr.rel (0) target = $region21
    $region20: #{tpu_custom_call.1} parent=1 // pred_region
      _
    $region21: #{tpu_custom_call.1} parent=1 // pred_fallthru
      _
    // Predicated region
    $region22: #{tpu_custom_call.1} parent=1 // pred_check
      _
    $region23: #{tpu_custom_call.1} parent=1 // pred_check_branch
      %57 = sbr.rel (0) target = $region25
    $region24: #{tpu_custom_call.1} parent=1 // pred_region
      %s59 = ssub.s32 2048, 2048
      %60 = vsyncadd [#allocation9], %s59
      %s61 = sshll.u32 [#allocation8], 4
      %s62 = int_to_ptr.vmem [resolvable:$true] %s61
      %67 = dma.hbm_to_vmem [thread:$0]  %s5, 2048, %s62, [#allocation9], 128, 128, 8
    $region25: #{tpu_custom_call.1} parent=1 // pred_fallthru
      _
    // Predicated region
    $region26: #{tpu_custom_call.1} parent=1 // pred_check
      _
    $region27: #{tpu_custom_call.1} parent=1 // pred_check_branch
      %69 = sbr.rel (0) target = $region29
    $region28: #{tpu_custom_call.1} parent=1 // pred_region
      %s71 = ssub.s32 2048, 2048
      %72 = vsyncadd [#allocation9], %s71
      %s73 = sshll.u32 [#allocation10], 4
      %s74 = int_to_ptr.vmem [resolvable:$true] %s73
      %79 = dma.hbm_to_vmem [thread:$0]  %s6, 2048, %s74, [#allocation9], 128, 128, 8
    $region29: #{tpu_custom_call.1} parent=1 // pred_fallthru
      _
    // Predicated region
    $region30: #{tpu_custom_call.1} parent=1 // pred_check
      _
    $region31: #{tpu_custom_call.1} parent=1 // pred_check_branch
      %81 = sbr.rel (0) target = $region33
    $region32: #{tpu_custom_call.1} parent=1 // pred_region
      %82 = dma.done [#allocation3], 512
    $region33: #{tpu_custom_call.1} parent=1 // pred_fallthru
      _
    // Predicated region
    $region34: #{tpu_custom_call.1} parent=1 // pred_check
      _
    $region35: #{tpu_custom_call.1} parent=1 // pred_check_branch
      %84 = sbr.rel (0) target = $region37
    $region36: #{tpu_custom_call.1} parent=1 // pred_region
      %85 = dma.done [#allocation6], 3072
    $region37: #{tpu_custom_call.1} parent=1 // pred_fallthru
      _
    // Predicated region
    $region38: #{tpu_custom_call.1} parent=1 // pred_check
      _
    $region39: #{tpu_custom_call.1} parent=1 // pred_check_branch
      %87 = sbr.rel (0) target = $region41
    $region40: #{tpu_custom_call.1} parent=1 // pred_region
      %88 = dma.done [#allocation6], 1024
    $region41: #{tpu_custom_call.1} parent=1 // pred_fallthru
      _
    // Predicated region
    $region42: #{tpu_custom_call.1} parent=1 // pred_check
      _
    $region43: #{tpu_custom_call.1} parent=1 // pred_check_branch
      %90 = sbr.rel (0) target = $region45
    $region44: #{tpu_custom_call.1} parent=1 // pred_region
      %91 = dma.done [#allocation9], 2048
    $region45: #{tpu_custom_call.1} parent=1 // pred_fallthru
      _
    // Predicated region
    $region46: #{tpu_custom_call.1} parent=1 // pred_check
      _
    $region47: #{tpu_custom_call.1} parent=1 // pred_check_branch
      %93 = sbr.rel (0) target = $region49
    $region48: #{tpu_custom_call.1} parent=1 // pred_region
      %94 = dma.done [#allocation9], 2048
    $region49: #{tpu_custom_call.1} parent=1 // pred_fallthru
      _
    %v96 = vld [vmem:[#allocation2] sm:$0xff]
    %v97 = vld [vmem:[#allocation2 + $0x8] sm:$0xff]
    %v98 = vld [vmem:[#allocation2 + $0x10] sm:$0xff]
    %v99 = vld [vmem:[#allocation2 + $0x18] sm:$0xff]
    %100 = vadd.xlane.f32.xlu0 %v96
    %v101 = vpop.xlane.xlu0 %100
    %102 = vadd.xlane.f32.xlu0 %v97
    %v103 = vpop.xlane.xlu0 %102
    %104 = vadd.xlane.f32.xlu0 %v98
    %v105 = vpop.xlane.xlu0 %104
    %106 = vadd.xlane.f32.xlu0 %v99
    %v107 = vpop.xlane.xlu0 %106
    %v108 = vrcp.pop 128.0
    %v109 = vmul.f32 %v101, %v108
    %v110 = vmul.f32 %v103, %v108
    %v111 = vmul.f32 %v105, %v108
    %v112 = vmul.f32 %v107, %v108
    %v113 = vmul.f32 %v96, %v96
    %v114 = vmul.f32 %v97, %v97
    %v115 = vmul.f32 %v98, %v98
    %v116 = vmul.f32 %v99, %v99
    %117 = vadd.xlane.f32.xlu0 %v113
    %v118 = vpop.xlane.xlu0 %117
    %119 = vadd.xlane.f32.xlu0 %v114
    %v120 = vpop.xlane.xlu0 %119
    %121 = vadd.xlane.f32.xlu0 %v115
    %v122 = vpop.xlane.xlu0 %121
    %123 = vadd.xlane.f32.xlu0 %v116
    %v124 = vpop.xlane.xlu0 %123
    %v125 = vmul.f32 %v118, %v108
    %v126 = vmul.f32 %v120, %v108
    %v127 = vmul.f32 %v122, %v108
    %v128 = vmul.f32 %v124, %v108
    %v129 = vmul.f32 %v109, %v109
    %v130 = vmul.f32 %v110, %v110
    %v131 = vmul.f32 %v111, %v111
    %v132 = vmul.f32 %v112, %v112
    %v133 = vsub.f32 %v125, %v129
    %v134 = vsub.f32 %v126, %v130
    %v135 = vsub.f32 %v127, %v131
    %v136 = vsub.f32 %v128, %v132
    %v137 = vsub.f32 %v96, %v109
    %v138 = vsub.f32 %v97, %v110
    %v139 = vsub.f32 %v98, %v111
    %v140 = vsub.f32 %v99, %v112
    %v141 = vadd.f32 %v133, 1e-05
    %v142 = vadd.f32 %v134, 1e-05
    %v143 = vadd.f32 %v135, 1e-05
    %v144 = vadd.f32 %v136, 1e-05
    %v145 = vrsqrt.pop %v141
    %v146 = vrsqrt.pop %v142
    %v147 = vrsqrt.pop %v143
    %v148 = vrsqrt.pop %v144
    %v149 = vmul.f32 %v137, %v145
    %v150 = vmul.f32 %v138, %v146
    %v151 = vmul.f32 %v139, %v147
    %v152 = vmul.f32 %v140, %v148
    %v153 = vpack.c.bf16 %v150, %v149
    %v154 = vpack.c.bf16 %v152, %v151
    %v155 = vld [vmem:[#allocation5] sm:$0xff]
    %v156 = vld [vmem:[#allocation5 + $0x8] sm:$0xf]
    %v157 = vld [vmem:[#allocation5 + $0xc] sm:$0xff]
    %v158 = vld [vmem:[#allocation5 + $0x14] sm:$0xf]
    %v159 = vld [vmem:[#allocation5 + $0x18] sm:$0xff]
    %v160 = vld [vmem:[#allocation5 + $0x20] sm:$0xf]
    %v161 = vld [vmem:[#allocation5 + $0x24] sm:$0xff]
    %v162 = vld [vmem:[#allocation5 + $0x2c] sm:$0xf]
    %v163 = vld [vmem:[#allocation5 + $0x30] sm:$0xff]
    %v164 = vld [vmem:[#allocation5 + $0x38] sm:$0xf]
    %v165 = vld [vmem:[#allocation5 + $0x3c] sm:$0xff]
    %v166 = vld [vmem:[#allocation5 + $0x44] sm:$0xf]
    %v167 = vld [vmem:[#allocation5 + $0x48] sm:$0xff]
    %v168 = vld [vmem:[#allocation5 + $0x50] sm:$0xf]
    %v169 = vld [vmem:[#allocation5 + $0x54] sm:$0xff]
    %v170 = vld [vmem:[#allocation5 + $0x5c] sm:$0xf]
    %v171 = vld [vmem:[#allocation5 + $0x60] sm:$0xff]
    %v172 = vld [vmem:[#allocation5 + $0x68] sm:$0xf]
    %v173 = vld [vmem:[#allocation5 + $0x6c] sm:$0xff]
    %v174 = vld [vmem:[#allocation5 + $0x74] sm:$0xf]
    %v175 = vld [vmem:[#allocation5 + $0x78] sm:$0xff]
    %v176 = vld [vmem:[#allocation5 + $0x80] sm:$0xf]
    %v177 = vld [vmem:[#allocation5 + $0x84] sm:$0xff]
    %v178 = vld [vmem:[#allocation5 + $0x8c] sm:$0xf]
    %v179 = vld [vmem:[#allocation5 + $0x90] sm:$0xff]
    %v180 = vld [vmem:[#allocation5 + $0x98] sm:$0xf]
    %v181 = vld [vmem:[#allocation5 + $0x9c] sm:$0xff]
    %v182 = vld [vmem:[#allocation5 + $0xa4] sm:$0xf]
    %v183 = vld [vmem:[#allocation5 + $0xa8] sm:$0xff]
    %v184 = vld [vmem:[#allocation5 + $0xb0] sm:$0xf]
    %v185 = vld [vmem:[#allocation5 + $0xb4] sm:$0xff]
    %v186 = vld [vmem:[#allocation5 + $0xbc] sm:$0xf]
    %v187 = vld [vmem:[%s2] sm:$0x7]
    %v189 = vlaneseq
    %v190 = vshrl.u32 %v189, 7
    %v191 = vsub.s32 0, %v190
    %v192 = vrot.slane %v187, %v191
    %v193 = vlaneseq
    %v194 = vshrl.u32 %v193, 7
    %v195 = vsub.s32 1, %v194
    %v196 = vrot.slane %v187, %v195
    %v197 = vlaneseq
    %v198 = vshrl.u32 %v197, 7
    %v199 = vsub.s32 2, %v198
    %v200 = vrot.slane %v187, %v199
    %v236 = vunpack.c.l.b16 %v155
    %v237 = vunpack.c.h.b16 %v155
    %v238 = vunpack.c.l.b16 %v156
    %v239 = vunpack.c.l.b16 %v157
    %v240 = vunpack.c.h.b16 %v157
    %v241 = vunpack.c.l.b16 %v158
    %v242 = vunpack.c.l.b16 %v159
    %v243 = vunpack.c.h.b16 %v159
    %v244 = vunpack.c.l.b16 %v160
    %v245 = vunpack.c.l.b16 %v161
    %v246 = vunpack.c.h.b16 %v161
    %v247 = vunpack.c.l.b16 %v162
    %v248 = vunpack.c.l.b16 %v163
    %v249 = vunpack.c.h.b16 %v163
    %v250 = vunpack.c.l.b16 %v164
    %v251 = vunpack.c.l.b16 %v165
    %v252 = vunpack.c.h.b16 %v165
    %v253 = vunpack.c.l.b16 %v166
    %v254 = vunpack.c.l.b16 %v167
    %v255 = vunpack.c.h.b16 %v167
    %v256 = vunpack.c.l.b16 %v168
    %v257 = vunpack.c.l.b16 %v169
    %v258 = vunpack.c.h.b16 %v169
    %v259 = vunpack.c.l.b16 %v170
    %v260 = vunpack.c.l.b16 %v171
    %v261 = vunpack.c.h.b16 %v171
    %v262 = vunpack.c.l.b16 %v172
    %v263 = vunpack.c.l.b16 %v173
    %v264 = vunpack.c.h.b16 %v173
    %v265 = vunpack.c.l.b16 %v174
    %v266 = vunpack.c.l.b16 %v175
    %v267 = vunpack.c.h.b16 %v175
    %v268 = vunpack.c.l.b16 %v176
    %v269 = vunpack.c.l.b16 %v177
    %v270 = vunpack.c.h.b16 %v177
    %v271 = vunpack.c.l.b16 %v178
    %v272 = vunpack.c.l.b16 %v179
    %v273 = vunpack.c.h.b16 %v179
    %v274 = vunpack.c.l.b16 %v180
    %v275 = vunpack.c.l.b16 %v181
    %v276 = vunpack.c.h.b16 %v181
    %v277 = vunpack.c.l.b16 %v182
    %v278 = vunpack.c.l.b16 %v183
    %v279 = vunpack.c.h.b16 %v183
    %v280 = vunpack.c.l.b16 %v184
    %v281 = vunpack.c.l.b16 %v185
    %v282 = vunpack.c.h.b16 %v185
    %v283 = vunpack.c.l.b16 %v186
    %v284 = vpack.c.b16 %v239, %v236
    %v285 = vpack.c.b16 %v240, %v237
    %v286 = vpack.c.b16 %v241, %v238
    %v287 = vpack.c.b16 %v245, %v242
    %v288 = vpack.c.b16 %v246, %v243
    %v289 = vpack.c.b16 %v247, %v244
    %v290 = vpack.c.b16 %v251, %v248
    %v291 = vpack.c.b16 %v252, %v249
    %v292 = vpack.c.b16 %v253, %v250
    %v293 = vpack.c.b16 %v257, %v254
    %v294 = vpack.c.b16 %v258, %v255
    %v295 = vpack.c.b16 %v259, %v256
    %v296 = vpack.c.b16 %v263, %v260
    %v297 = vpack.c.b16 %v264, %v261
    %v298 = vpack.c.b16 %v265, %v262
    %v299 = vpack.c.b16 %v269, %v266
    %v300 = vpack.c.b16 %v270, %v267
    %v301 = vpack.c.b16 %v271, %v268
    %v302 = vpack.c.b16 %v275, %v272
    %v303 = vpack.c.b16 %v276, %v273
    %v304 = vpack.c.b16 %v277, %v274
    %v305 = vpack.c.b16 %v281, %v278
    %v306 = vpack.c.b16 %v282, %v279
    %v307 = vpack.c.b16 %v283, %v280
    %332 = vmatprep.subr.bf16.mxu0 %v285
    %333 = vmatpush1.bf16.msra.mxu0 %v284
    %334 = vmatprep.subr.bf16.mxu0 %v288
    %335 = vmatpush1.bf16.msra.mxu0 %v287
    %336 = vmatprep.subr.bf16.mxu0 %v291
    %337 = vmatpush1.bf16.msra.mxu0 %v290
    %338 = vmatprep.subr.bf16.mxu0 %v294
    %339 = vmatpush1.bf16.msra.mxu0 %v293
    %340 = vmatprep.subr.bf16.mxu0 %v297
    %341 = vmatpush1.bf16.msra.mxu0 %v296
    %342 = vmatprep.subr.bf16.mxu0 %v300
    %343 = vmatpush1.bf16.msra.mxu0 %v299
    %344 = vmatprep.subr.bf16.mxu0 %v303
    %345 = vmatpush1.bf16.msra.mxu0 %v302
    %346 = vmatprep.subr.bf16.mxu0 %v306
    %347 = vmatpush1.bf16.msra.mxu0 %v305
    %348 = vmatprep.subr.bf16.mxu0 0
    %349 = vmatpush1.bf16.msra.mxu0 0
    %350 = vmatprep.subr.bf16.mxu0 0
    %351 = vmatpush1.bf16.msra.mxu0 0
    %352 = vmatprep.subr.bf16.mxu0 0
    %353 = vmatpush1.bf16.msra.mxu0 0
    %354 = vmatprep.subr.bf16.mxu0 0
    %355 = vmatpush1.bf16.msra.mxu0 0
    %356 = vmatprep.subr.bf16.mxu0 0
    %357 = vmatpush1.bf16.msra.mxu0 0
    %358 = vmatprep.subr.bf16.mxu0 0
    %359 = vmatpush1.bf16.msra.mxu0 0
    %360 = vmatprep.subr.bf16.mxu0 0
    %361 = vmatpush1.bf16.msra.mxu0 0
    %362 = vmatprep.subr.bf16.mxu0 0
    %363 = vmatpush1.bf16.msra.mxu0 0
    %364 = vmatprep.mubr.bf16.mxu0 0
    %365 = vmatmul.mubr.bf16.gmra.mrb[0].mxu0 %v153
    %v366 = vpop.f32.mrb[0].mxu0
    %v367 = vadd.f32 %v192, %v366
    %v368 = vpop.f32.mrb[0].mxu0
    %v369 = vadd.f32 %v196, %v368
    %v370 = vpop.f32.mrb[0].mxu0
    %v371 = vadd.f32 %v192, %v370
    %v372 = vpop.f32.mrb[0].mxu0
    %v373 = vadd.f32 %v196, %v372
    %374 = vmatprep.mubr.bf16.mxu0 0
    %375 = vmatmul.mubr.bf16.gmra.mrb[0].mxu0 %v154
    %v376 = vpop.f32.mrb[0].mxu0
    %v377 = vadd.f32 %v192, %v376
    %v378 = vpop.f32.mrb[0].mxu0
    %v379 = vadd.f32 %v196, %v378
    %v380 = vpop.f32.mrb[0].mxu0
    %v381 = vadd.f32 %v192, %v380
    %v382 = vpop.f32.mrb[0].mxu0
    %v383 = vadd.f32 %v196, %v382
    %384 = vdwg.mxu0
    %385 = vmatprep.subr.bf16.mxu0 0
    %386 = vmatpush1.bf16.msra.mxu0 %v286
    %387 = vmatprep.subr.bf16.mxu0 0
    %388 = vmatpush1.bf16.msra.mxu0 %v289
    %389 = vmatprep.subr.bf16.mxu0 0
    %390 = vmatpush1.bf16.msra.mxu0 %v292
    %391 = vmatprep.subr.bf16.mxu0 0
    %392 = vmatpush1.bf16.msra.mxu0 %v295
    %393 = vmatprep.subr.bf16.mxu0 0
    %394 = vmatpush1.bf16.msra.mxu0 %v298
    %395 = vmatprep.subr.bf16.mxu0 0
    %396 = vmatpush1.bf16.msra.mxu0 %v301
    %397 = vmatprep.subr.bf16.mxu0 0
    %398 = vmatpush1.bf16.msra.mxu0 %v304
    %399 = vmatprep.subr.bf16.mxu0 0
    %400 = vmatpush1.bf16.msra.mxu0 %v307
    %401 = vmatprep.subr.bf16.mxu0 0
    %402 = vmatpush1.bf16.msra.mxu0 0
    %403 = vmatprep.subr.bf16.mxu0 0
    %404 = vmatpush1.bf16.msra.mxu0 0
    %405 = vmatprep.subr.bf16.mxu0 0
    %406 = vmatpush1.bf16.msra.mxu0 0
    %407 = vmatprep.subr.bf16.mxu0 0
    %408 = vmatpush1.bf16.msra.mxu0 0
    %409 = vmatprep.subr.bf16.mxu0 0
    %410 = vmatpush1.bf16.msra.mxu0 0
    %411 = vmatprep.subr.bf16.mxu0 0
    %412 = vmatpush1.bf16.msra.mxu0 0
    %413 = vmatprep.subr.bf16.mxu0 0
    %414 = vmatpush1.bf16.msra.mxu0 0
    %415 = vmatprep.subr.bf16.mxu0 0
    %416 = vmatpush1.bf16.msra.mxu0 0
    %417 = vmatprep.mubr.bf16.mxu0 0
    %418 = vmatmul.mubr.bf16.gmra.mrb[0].mxu0 %v153
    %v419 = vpop.f32.mrb[0].mxu0
    %v420 = vadd.f32 %v200, %v419
    %v421 = vpop.f32.mrb[0].mxu0
    %v422 = vpop.f32.mrb[0].mxu0
    %v423 = vadd.f32 %v200, %v422
    %v424 = vpop.f32.mrb[0].mxu0
    %425 = vmatprep.mubr.bf16.mxu0 0
    %426 = vmatmul.mubr.bf16.gmra.mrb[0].mxu0 %v154
    %v427 = vpop.f32.mrb[0].mxu0
    %v428 = vadd.f32 %v200, %v427
    %v429 = vpop.f32.mrb[0].mxu0
    %v430 = vpop.f32.mrb[0].mxu0
    %v431 = vadd.f32 %v200, %v430
    %v432 = vpop.f32.mrb[0].mxu0
    %433 = vdwg.mxu0
    %v434 = vld [vmem:[#allocation8] sm:$0xff]
    %v435 = vld [vmem:[#allocation8 + $0x8] sm:$0xff]
    %v436 = vld [vmem:[#allocation8 + $0x10] sm:$0xff]
    %v437 = vld [vmem:[#allocation8 + $0x18] sm:$0xff]
    %v438 = vld [vmem:[#allocation8 + $0x20] sm:$0xff]
    %v439 = vld [vmem:[#allocation8 + $0x28] sm:$0xff]
    %v440 = vld [vmem:[#allocation8 + $0x30] sm:$0xff]
    %v441 = vld [vmem:[#allocation8 + $0x38] sm:$0xff]
    %v442 = vld [vmem:[#allocation8 + $0x40] sm:$0xff]
    %v443 = vld [vmem:[#allocation8 + $0x48] sm:$0xff]
    %v444 = vld [vmem:[#allocation8 + $0x50] sm:$0xff]
    %v445 = vld [vmem:[#allocation8 + $0x58] sm:$0xff]
    %v446 = vld [vmem:[#allocation8 + $0x60] sm:$0xff]
    %v447 = vld [vmem:[#allocation8 + $0x68] sm:$0xff]
    %v448 = vld [vmem:[#allocation8 + $0x70] sm:$0xff]
    %v449 = vld [vmem:[#allocation8 + $0x78] sm:$0xff]
    %v450 = vmul.f32 %v369, %v434
    %v451 = vmul.f32 %v373, %v435
    %v452 = vmul.f32 %v369, %v436
    %v453 = vmul.f32 %v373, %v437
    %v454 = vmul.f32 %v369, %v438
    %v455 = vmul.f32 %v373, %v439
    %v456 = vmul.f32 %v369, %v440
    %v457 = vmul.f32 %v373, %v441
    %v458 = vmul.f32 %v369, %v442
    %v459 = vmul.f32 %v373, %v443
    %v460 = vmul.f32 %v369, %v444
    %v461 = vmul.f32 %v373, %v445
    %v462 = vmul.f32 %v369, %v446
    %v463 = vmul.f32 %v373, %v447
    %v464 = vmul.f32 %v369, %v448
    %v465 = vmul.f32 %v373, %v449
    %v466 = vmul.f32 %v379, %v434
    %v467 = vmul.f32 %v383, %v435
    %v468 = vmul.f32 %v379, %v436
    %v469 = vmul.f32 %v383, %v437
    %v470 = vmul.f32 %v379, %v438
    %v471 = vmul.f32 %v383, %v439
    %v472 = vmul.f32 %v379, %v440
    %v473 = vmul.f32 %v383, %v441
    %v474 = vmul.f32 %v379, %v442
    %v475 = vmul.f32 %v383, %v443
    %v476 = vmul.f32 %v379, %v444
    %v477 = vmul.f32 %v383, %v445
    %v478 = vmul.f32 %v379, %v446
    %v479 = vmul.f32 %v383, %v447
    %v480 = vmul.f32 %v379, %v448
    %v481 = vmul.f32 %v383, %v449
    %v482 = vpack.c.bf16 %v451, %v450
    %v483 = vpack.c.bf16 %v453, %v452
    %v484 = vpack.c.bf16 %v455, %v454
    %v485 = vpack.c.bf16 %v457, %v456
    %v486 = vpack.c.bf16 %v459, %v458
    %v487 = vpack.c.bf16 %v461, %v460
    %v488 = vpack.c.bf16 %v463, %v462
    %v489 = vpack.c.bf16 %v465, %v464
    %v490 = vpack.c.bf16 %v467, %v466
    %v491 = vpack.c.bf16 %v469, %v468
    %v492 = vpack.c.bf16 %v471, %v470
    %v493 = vpack.c.bf16 %v473, %v472
    %v494 = vpack.c.bf16 %v475, %v474
    %v495 = vpack.c.bf16 %v477, %v476
    %v496 = vpack.c.bf16 %v479, %v478
    %v497 = vpack.c.bf16 %v481, %v480
    %v498 = vmul.f32 %v420, %v434
    %v499 = vmul.f32 %v423, %v435
    %v500 = vmul.f32 %v420, %v436
    %v501 = vmul.f32 %v423, %v437
    %v502 = vmul.f32 %v420, %v438
    %v503 = vmul.f32 %v423, %v439
    %v504 = vmul.f32 %v420, %v440
    %v505 = vmul.f32 %v423, %v441
    %v506 = vmul.f32 %v420, %v442
    %v507 = vmul.f32 %v423, %v443
    %v508 = vmul.f32 %v420, %v444
    %v509 = vmul.f32 %v423, %v445
    %v510 = vmul.f32 %v420, %v446
    %v511 = vmul.f32 %v423, %v447
    %v512 = vmul.f32 %v420, %v448
    %v513 = vmul.f32 %v423, %v449
    %v514 = vmul.f32 %v428, %v434
    %v515 = vmul.f32 %v431, %v435
    %v516 = vmul.f32 %v428, %v436
    %v517 = vmul.f32 %v431, %v437
    %v518 = vmul.f32 %v428, %v438
    %v519 = vmul.f32 %v431, %v439
    %v520 = vmul.f32 %v428, %v440
    %v521 = vmul.f32 %v431, %v441
    %v522 = vmul.f32 %v428, %v442
    %v523 = vmul.f32 %v431, %v443
    %v524 = vmul.f32 %v428, %v444
    %v525 = vmul.f32 %v431, %v445
    %v526 = vmul.f32 %v428, %v446
    %v527 = vmul.f32 %v431, %v447
    %v528 = vmul.f32 %v428, %v448
    %v529 = vmul.f32 %v431, %v449
    %v530 = vpack.c.bf16 %v499, %v498
    %v531 = vpack.c.bf16 %v501, %v500
    %v532 = vpack.c.bf16 %v503, %v502
    %v533 = vpack.c.bf16 %v505, %v504
    %v534 = vpack.c.bf16 %v507, %v506
    %v535 = vpack.c.bf16 %v509, %v508
    %v536 = vpack.c.bf16 %v511, %v510
    %v537 = vpack.c.bf16 %v513, %v512
    %v538 = vpack.c.bf16 %v515, %v514
    %v539 = vpack.c.bf16 %v517, %v516
    %v540 = vpack.c.bf16 %v519, %v518
    %v541 = vpack.c.bf16 %v521, %v520
    %v542 = vpack.c.bf16 %v523, %v522
    %v543 = vpack.c.bf16 %v525, %v524
    %v544 = vpack.c.bf16 %v527, %v526
    %v545 = vpack.c.bf16 %v529, %v528
    %v546 = vpack.c.bf16 %v371, %v367
    %v547 = vpack.c.bf16 %v381, %v377
    %548 = vmatprep.subr.bf16.mxu0 0
    %549 = vmatpush1.bf16.xpose.msra.mxu0 %v482
    %550 = vmatprep.subr.bf16.mxu0 0
    %551 = vmatpush1.bf16.xpose.msra.mxu0 %v483
    %552 = vmatprep.subr.bf16.mxu0 0
    %553 = vmatpush1.bf16.xpose.msra.mxu0 %v484
    %554 = vmatprep.subr.bf16.mxu0 0
    %555 = vmatpush1.bf16.xpose.msra.mxu0 %v485
    %556 = vmatprep.subr.bf16.mxu0 0
    %557 = vmatpush1.bf16.xpose.msra.mxu0 %v486
    %558 = vmatprep.subr.bf16.mxu0 0
    %559 = vmatpush1.bf16.xpose.msra.mxu0 %v487
    %560 = vmatprep.subr.bf16.mxu0 0
    %561 = vmatpush1.bf16.xpose.msra.mxu0 %v488
    %562 = vmatprep.subr.bf16.mxu0 0
    %563 = vmatpush1.bf16.xpose.msra.mxu0 %v489
    %564 = vmatprep.subr.bf16.mxu0 0
    %565 = vmatpush1.bf16.xpose.msra.mxu0 0
    %566 = vmatprep.subr.bf16.mxu0 0
    %567 = vmatpush1.bf16.xpose.msra.mxu0 0
    %568 = vmatprep.subr.bf16.mxu0 0
    %569 = vmatpush1.bf16.xpose.msra.mxu0 0
    %570 = vmatprep.subr.bf16.mxu0 0
    %571 = vmatpush1.bf16.xpose.msra.mxu0 0
    %572 = vmatprep.subr.bf16.mxu0 0
    %573 = vmatpush1.bf16.xpose.msra.mxu0 0
    %574 = vmatprep.subr.bf16.mxu0 0
    %575 = vmatpush1.bf16.xpose.msra.mxu0 0
    %576 = vmatprep.subr.bf16.mxu0 0
    %577 = vmatpush1.bf16.xpose.msra.mxu0 0
    %578 = vmatprep.subr.bf16.mxu0 0
    %579 = vmatpush1.bf16.xpose.msra.mxu0 0
    %580 = vmatprep.mubr.bf16.mxu0 0
    %581 = vmatmul.mubr.bf16.gmra.mrb[0].mxu0 %v546
    %v582 = vpop.f32.mrb[0].mxu0
    %v583 = vadd.f32 0.0, %v582
    %v584 = vpop.f32.mrb[0].mxu0
    %v585 = vpop.f32.mrb[0].mxu0
    %v586 = vadd.f32 0.0, %v585
    %v587 = vpop.f32.mrb[0].mxu0
    %588 = vdwg.mxu0
    %589 = vmatprep.subr.bf16.mxu0 0
    %590 = vmatpush1.bf16.xpose.msra.mxu0 %v490
    %591 = vmatprep.subr.bf16.mxu0 0
    %592 = vmatpush1.bf16.xpose.msra.mxu0 %v491
    %593 = vmatprep.subr.bf16.mxu0 0
    %594 = vmatpush1.bf16.xpose.msra.mxu0 %v492
    %595 = vmatprep.subr.bf16.mxu0 0
    %596 = vmatpush1.bf16.xpose.msra.mxu0 %v493
    %597 = vmatprep.subr.bf16.mxu0 0
    %598 = vmatpush1.bf16.xpose.msra.mxu0 %v494
    %599 = vmatprep.subr.bf16.mxu0 0
    %600 = vmatpush1.bf16.xpose.msra.mxu0 %v495
    %601 = vmatprep.subr.bf16.mxu0 0
    %602 = vmatpush1.bf16.xpose.msra.mxu0 %v496
    %603 = vmatprep.subr.bf16.mxu0 0
    %604 = vmatpush1.bf16.xpose.msra.mxu0 %v497
    %605 = vmatprep.subr.bf16.mxu0 0
    %606 = vmatpush1.bf16.xpose.msra.mxu0 0
    %607 = vmatprep.subr.bf16.mxu0 0
    %608 = vmatpush1.bf16.xpose.msra.mxu0 0
    %609 = vmatprep.subr.bf16.mxu0 0
    %610 = vmatpush1.bf16.xpose.msra.mxu0 0
    %611 = vmatprep.subr.bf16.mxu0 0
    %612 = vmatpush1.bf16.xpose.msra.mxu0 0
    %613 = vmatprep.subr.bf16.mxu0 0
    %614 = vmatpush1.bf16.xpose.msra.mxu0 0
    %615 = vmatprep.subr.bf16.mxu0 0
    %616 = vmatpush1.bf16.xpose.msra.mxu0 0
    %617 = vmatprep.subr.bf16.mxu0 0
    %618 = vmatpush1.bf16.xpose.msra.mxu0 0
    %619 = vmatprep.subr.bf16.mxu0 0
    %620 = vmatpush1.bf16.xpose.msra.mxu0 0
    %621 = vmatprep.mubr.bf16.mxu0 0
    %622 = vmatmul.mubr.bf16.gmra.mrb[0].mxu0 %v547
    %v623 = vpop.f32.mrb[0].mxu0
    %v624 = vadd.f32 0.0, %v623
    %v625 = vpop.f32.mrb[0].mxu0
    %v626 = vpop.f32.mrb[0].mxu0
    %v627 = vadd.f32 0.0, %v626
    %v628 = vpop.f32.mrb[0].mxu0
    %629 = vdwg.mxu0
    %630 = vmax.xlane.f32.xlu0 %v583
    %v631 = vpop.xlane.xlu0 %630
    %632 = vmax.xlane.f32.xlu0 %v586
    %v633 = vpop.xlane.xlu0 %632
    %634 = vmax.xlane.f32.xlu0 %v624
    %v635 = vpop.xlane.xlu0 %634
    %636 = vmax.xlane.f32.xlu0 %v627
    %v637 = vpop.xlane.xlu0 %636
    %v638 = vsub.f32 %v583, %v631
    %v639 = vsub.f32 %v586, %v633
    %v640 = vsub.f32 %v624, %v635
    %v641 = vsub.f32 %v627, %v637
    %v642 = vmul.f32 %v638, 1.442695
    %v643 = vpow.pop %v642
    %v644 = vmul.f32 %v639, 1.442695
    %v645 = vpow.pop %v644
    %v646 = vmul.f32 %v640, 1.442695
    %v647 = vpow.pop %v646
    %v648 = vmul.f32 %v641, 1.442695
    %v649 = vpow.pop %v648
    %v650 = vld [vmem:[#allocation10] sm:$0xff]
    %v651 = vld [vmem:[#allocation10 + $0x8] sm:$0xff]
    %v652 = vld [vmem:[#allocation10 + $0x10] sm:$0xff]
    %v653 = vld [vmem:[#allocation10 + $0x18] sm:$0xff]
    %v654 = vld [vmem:[#allocation10 + $0x20] sm:$0xff]
    %v655 = vld [vmem:[#allocation10 + $0x28] sm:$0xff]
    %v656 = vld [vmem:[#allocation10 + $0x30] sm:$0xff]
    %v657 = vld [vmem:[#allocation10 + $0x38] sm:$0xff]
    %v658 = vld [vmem:[#allocation10 + $0x40] sm:$0xff]
    %v659 = vld [vmem:[#allocation10 + $0x48] sm:$0xff]
    %v660 = vld [vmem:[#allocation10 + $0x50] sm:$0xff]
    %v661 = vld [vmem:[#allocation10 + $0x58] sm:$0xff]
    %v662 = vld [vmem:[#allocation10 + $0x60] sm:$0xff]
    %v663 = vld [vmem:[#allocation10 + $0x68] sm:$0xff]
    %v664 = vld [vmem:[#allocation10 + $0x70] sm:$0xff]
    %v665 = vld [vmem:[#allocation10 + $0x78] sm:$0xff]
    %666 = vmatprep.subr.mxu0 0.0
    %667 = vmatpush1.msra.mxu0 %v650
    %668 = vmatprep.subr.mxu0 0.0
    %669 = vmatpush1.msra.mxu0 %v651
    %670 = vmatprep.subr.mxu0 0.0
    %671 = vmatpush1.msra.mxu0 %v652
    %672 = vmatprep.subr.mxu0 0.0
    %673 = vmatpush1.msra.mxu0 %v653
    %674 = vmatprep.subr.mxu0 0.0
    %675 = vmatpush1.msra.mxu0 %v654
    %676 = vmatprep.subr.mxu0 0.0
    %677 = vmatpush1.msra.mxu0 %v655
    %678 = vmatprep.subr.mxu0 0.0
    %679 = vmatpush1.msra.mxu0 %v656
    %680 = vmatprep.subr.mxu0 0.0
    %681 = vmatpush1.msra.mxu0 %v657
    %682 = vmatprep.subr.mxu0 0.0
    %683 = vmatpush1.msra.mxu0 %v658
    %684 = vmatprep.subr.mxu0 0.0
    %685 = vmatpush1.msra.mxu0 %v659
    %686 = vmatprep.subr.mxu0 0.0
    %687 = vmatpush1.msra.mxu0 %v660
    %688 = vmatprep.subr.mxu0 0.0
    %689 = vmatpush1.msra.mxu0 %v661
    %690 = vmatprep.subr.mxu0 0.0
    %691 = vmatpush1.msra.mxu0 %v662
    %692 = vmatprep.subr.mxu0 0.0
    %693 = vmatpush1.msra.mxu0 %v663
    %694 = vmatprep.subr.mxu0 0.0
    %695 = vmatpush1.msra.mxu0 %v664
    %696 = vmatprep.subr.mxu0 0.0
    %697 = vmatpush1.msra.mxu0 %v665
    %698 = vmatprep.subr.mxu0 0.0
    %699 = vmatpush1.msra.mxu0 0.0
    %700 = vmatprep.subr.mxu0 0.0
    %701 = vmatpush1.msra.mxu0 0.0
    %702 = vmatprep.subr.mxu0 0.0
    %703 = vmatpush1.msra.mxu0 0.0
    %704 = vmatprep.subr.mxu0 0.0
    %705 = vmatpush1.msra.mxu0 0.0
    %706 = vmatprep.subr.mxu0 0.0
    %707 = vmatpush1.msra.mxu0 0.0
    %708 = vmatprep.subr.mxu0 0.0
    %709 = vmatpush1.msra.mxu0 0.0
    %710 = vmatprep.subr.mxu0 0.0
    %711 = vmatpush1.msra.mxu0 0.0
    %712 = vmatprep.subr.mxu0 0.0
    %713 = vmatpush1.msra.mxu0 0.0
    %714 = vmatprep.subr.mxu0 0.0
    %715 = vmatpush1.msra.mxu0 0.0
    %716 = vmatprep.subr.mxu0 0.0
    %717 = vmatpush1.msra.mxu0 0.0
    %718 = vmatprep.subr.mxu0 0.0
    %719 = vmatpush1.msra.mxu0 0.0
    %720 = vmatprep.subr.mxu0 0.0
    %721 = vmatpush1.msra.mxu0 0.0
    %722 = vmatprep.subr.mxu0 0.0
    %723 = vmatpush1.msra.mxu0 0.0
    %724 = vmatprep.subr.mxu0 0.0
    %725 = vmatpush1.msra.mxu0 0.0
    %726 = vmatprep.subr.mxu0 0.0
    %727 = vmatpush1.msra.mxu0 0.0
    %728 = vmatprep.subr.mxu0 0.0
    %729 = vmatpush1.msra.mxu0 0.0
    %730 = vmatprep.mubr.f32.mxu0 0.0
    %731 = vmatmul.mubr.f32.gmra.mrb[0].mxu0 %v643
    %v732 = vpop.f32.mrb[0].mxu0
    %v733 = vadd.f32 0.0, %v732
    %v734 = vpop.f32.mrb[0].mxu0
    %735 = vmatprep.mubr.f32.mxu0 0.0
    %736 = vmatmul.mubr.f32.gmra.mrb[0].mxu0 %v645
    %v737 = vpop.f32.mrb[0].mxu0
    %v738 = vadd.f32 0.0, %v737
    %v739 = vpop.f32.mrb[0].mxu0
    %740 = vmatprep.mubr.f32.mxu0 0.0
    %741 = vmatmul.mubr.f32.gmra.mrb[0].mxu0 %v647
    %v742 = vpop.f32.mrb[0].mxu0
    %v743 = vadd.f32 0.0, %v742
    %v744 = vpop.f32.mrb[0].mxu0
    %745 = vmatprep.mubr.f32.mxu0 0.0
    %746 = vmatmul.mubr.f32.gmra.mrb[0].mxu0 %v649
    %v747 = vpop.f32.mrb[0].mxu0
    %v748 = vadd.f32 0.0, %v747
    %v749 = vpop.f32.mrb[0].mxu0
    %750 = vdwg.mxu0
    %v751 = vrcp.pop %v733
    %v752 = vmul.f32 %v643, %v751
    %v753 = vrcp.pop %v738
    %v754 = vmul.f32 %v645, %v753
    %v755 = vrcp.pop %v743
    %v756 = vmul.f32 %v647, %v755
    %v757 = vrcp.pop %v748
    %v758 = vmul.f32 %v649, %v757
    %v759 = vpack.c.bf16 %v754, %v752
    %v760 = vpack.c.bf16 %v758, %v756
    %761 = vmatprep.subr.bf16.mxu0 0
    %762 = vmatpush1.bf16.msra.mxu0 %v530
    %763 = vmatprep.subr.bf16.mxu0 0
    %764 = vmatpush1.bf16.msra.mxu0 %v531
    %765 = vmatprep.subr.bf16.mxu0 0
    %766 = vmatpush1.bf16.msra.mxu0 %v532
    %767 = vmatprep.subr.bf16.mxu0 0
    %768 = vmatpush1.bf16.msra.mxu0 %v533
    %769 = vmatprep.subr.bf16.mxu0 0
    %770 = vmatpush1.bf16.msra.mxu0 %v534
    %771 = vmatprep.subr.bf16.mxu0 0
    %772 = vmatpush1.bf16.msra.mxu0 %v535
    %773 = vmatprep.subr.bf16.mxu0 0
    %774 = vmatpush1.bf16.msra.mxu0 %v536
    %775 = vmatprep.subr.bf16.mxu0 0
    %776 = vmatpush1.bf16.msra.mxu0 %v537
    %777 = vmatprep.subr.bf16.mxu0 0
    %778 = vmatpush1.bf16.msra.mxu0 0
    %779 = vmatprep.subr.bf16.mxu0 0
    %780 = vmatpush1.bf16.msra.mxu0 0
    %781 = vmatprep.subr.bf16.mxu0 0
    %782 = vmatpush1.bf16.msra.mxu0 0
    %783 = vmatprep.subr.bf16.mxu0 0
    %784 = vmatpush1.bf16.msra.mxu0 0
    %785 = vmatprep.subr.bf16.mxu0 0
    %786 = vmatpush1.bf16.msra.mxu0 0
    %787 = vmatprep.subr.bf16.mxu0 0
    %788 = vmatpush1.bf16.msra.mxu0 0
    %789 = vmatprep.subr.bf16.mxu0 0
    %790 = vmatpush1.bf16.msra.mxu0 0
    %791 = vmatprep.subr.bf16.mxu0 0
    %792 = vmatpush1.bf16.msra.mxu0 0
    %793 = vmatprep.mubr.bf16.mxu0 0
    %794 = vmatmul.mubr.bf16.gmra.mrb[0].mxu0 %v759
    %v795 = vpop.f32.mrb[0].mxu0
    %v796 = vadd.f32 0.0, %v795
    %v797 = vpop.f32.mrb[0].mxu0
    %v798 = vpop.f32.mrb[0].mxu0
    %v799 = vadd.f32 0.0, %v798
    %v800 = vpop.f32.mrb[0].mxu0
    %801 = vdwg.mxu0
    %802 = vmatprep.subr.bf16.mxu0 0
    %803 = vmatpush1.bf16.msra.mxu0 %v538
    %804 = vmatprep.subr.bf16.mxu0 0
    %805 = vmatpush1.bf16.msra.mxu0 %v539
    %806 = vmatprep.subr.bf16.mxu0 0
    %807 = vmatpush1.bf16.msra.mxu0 %v540
    %808 = vmatprep.subr.bf16.mxu0 0
    %809 = vmatpush1.bf16.msra.mxu0 %v541
    %810 = vmatprep.subr.bf16.mxu0 0
    %811 = vmatpush1.bf16.msra.mxu0 %v542
    %812 = vmatprep.subr.bf16.mxu0 0
    %813 = vmatpush1.bf16.msra.mxu0 %v543
    %814 = vmatprep.subr.bf16.mxu0 0
    %815 = vmatpush1.bf16.msra.mxu0 %v544
    %816 = vmatprep.subr.bf16.mxu0 0
    %817 = vmatpush1.bf16.msra.mxu0 %v545
    %818 = vmatprep.subr.bf16.mxu0 0
    %819 = vmatpush1.bf16.msra.mxu0 0
    %820 = vmatprep.subr.bf16.mxu0 0
    %821 = vmatpush1.bf16.msra.mxu0 0
    %822 = vmatprep.subr.bf16.mxu0 0
    %823 = vmatpush1.bf16.msra.mxu0 0
    %824 = vmatprep.subr.bf16.mxu0 0
    %825 = vmatpush1.bf16.msra.mxu0 0
    %826 = vmatprep.subr.bf16.mxu0 0
    %827 = vmatpush1.bf16.msra.mxu0 0
    %828 = vmatprep.subr.bf16.mxu0 0
    %829 = vmatpush1.bf16.msra.mxu0 0
    %830 = vmatprep.subr.bf16.mxu0 0
    %831 = vmatpush1.bf16.msra.mxu0 0
    %832 = vmatprep.subr.bf16.mxu0 0
    %833 = vmatpush1.bf16.msra.mxu0 0
    %834 = vmatprep.mubr.bf16.mxu0 0
    %835 = vmatmul.mubr.bf16.gmra.mrb[0].mxu0 %v760
    %v836 = vpop.f32.mrb[0].mxu0
    %v837 = vadd.f32 0.0, %v836
    %v838 = vpop.f32.mrb[0].mxu0
    %v839 = vpop.f32.mrb[0].mxu0
    %v840 = vadd.f32 0.0, %v839
    %v841 = vpop.f32.mrb[0].mxu0
    %842 = vdwg.mxu0
    %v843 = vpack.c.bf16 %v799, %v796
    %v844 = vpack.c.bf16 %v840, %v837
    %v845 = vld [vmem:[#allocation7] sm:$0xf]
    %v846 = vld [vmem:[#allocation7 + $0x4] sm:$0xf]
    %v847 = vld [vmem:[#allocation7 + $0x8] sm:$0xf]
    %v848 = vld [vmem:[#allocation7 + $0xc] sm:$0xf]
    %v849 = vld [vmem:[#allocation7 + $0x10] sm:$0xf]
    %v850 = vld [vmem:[#allocation7 + $0x14] sm:$0xf]
    %v851 = vld [vmem:[#allocation7 + $0x18] sm:$0xf]
    %v852 = vld [vmem:[#allocation7 + $0x1c] sm:$0xf]
    %v853 = vld [vmem:[#allocation7 + $0x20] sm:$0xf]
    %v854 = vld [vmem:[#allocation7 + $0x24] sm:$0xf]
    %v855 = vld [vmem:[#allocation7 + $0x28] sm:$0xf]
    %v856 = vld [vmem:[#allocation7 + $0x2c] sm:$0xf]
    %v857 = vld [vmem:[#allocation7 + $0x30] sm:$0xf]
    %v858 = vld [vmem:[#allocation7 + $0x34] sm:$0xf]
    %v859 = vld [vmem:[#allocation7 + $0x38] sm:$0xf]
    %v860 = vld [vmem:[#allocation7 + $0x3c] sm:$0xf]
    %v861 = vld [vmem:[%s4] sm:$0x1]
    %v863 = vlaneseq
    %v864 = vshrl.u32 %v863, 7
    %v865 = vsub.s32 0, %v864
    %v866 = vrot.slane %v861, %v865
    %v884 = vunpack.c.l.b16 %v845
    %v885 = vunpack.c.l.b16 %v846
    %v886 = vunpack.c.l.b16 %v847
    %v887 = vunpack.c.l.b16 %v848
    %v888 = vunpack.c.l.b16 %v849
    %v889 = vunpack.c.l.b16 %v850
    %v890 = vunpack.c.l.b16 %v851
    %v891 = vunpack.c.l.b16 %v852
    %v892 = vunpack.c.l.b16 %v853
    %v893 = vunpack.c.l.b16 %v854
    %v894 = vunpack.c.l.b16 %v855
    %v895 = vunpack.c.l.b16 %v856
    %v896 = vunpack.c.l.b16 %v857
    %v897 = vunpack.c.l.b16 %v858
    %v898 = vunpack.c.l.b16 %v859
    %v899 = vunpack.c.l.b16 %v860
    %v900 = vpack.c.b16 %v885, %v884
    %v901 = vpack.c.b16 %v887, %v886
    %v902 = vpack.c.b16 %v889, %v888
    %v903 = vpack.c.b16 %v891, %v890
    %v904 = vpack.c.b16 %v893, %v892
    %v905 = vpack.c.b16 %v895, %v894
    %v906 = vpack.c.b16 %v897, %v896
    %v907 = vpack.c.b16 %v899, %v898
    %916 = vmatprep.subr.bf16.mxu0 0
    %917 = vmatpush1.bf16.msra.mxu0 %v900
    %918 = vmatprep.subr.bf16.mxu0 0
    %919 = vmatpush1.bf16.msra.mxu0 %v901
    %920 = vmatprep.subr.bf16.mxu0 0
    %921 = vmatpush1.bf16.msra.mxu0 %v902
    %922 = vmatprep.subr.bf16.mxu0 0
    %923 = vmatpush1.bf16.msra.mxu0 %v903
    %924 = vmatprep.subr.bf16.mxu0 0
    %925 = vmatpush1.bf16.msra.mxu0 %v904
    %926 = vmatprep.subr.bf16.mxu0 0
    %927 = vmatpush1.bf16.msra.mxu0 %v905
    %928 = vmatprep.subr.bf16.mxu0 0
    %929 = vmatpush1.bf16.msra.mxu0 %v906
    %930 = vmatprep.subr.bf16.mxu0 0
    %931 = vmatpush1.bf16.msra.mxu0 %v907
    %932 = vmatprep.subr.bf16.mxu0 0
    %933 = vmatpush1.bf16.msra.mxu0 0
    %934 = vmatprep.subr.bf16.mxu0 0
    %935 = vmatpush1.bf16.msra.mxu0 0
    %936 = vmatprep.subr.bf16.mxu0 0
    %937 = vmatpush1.bf16.msra.mxu0 0
    %938 = vmatprep.subr.bf16.mxu0 0
    %939 = vmatpush1.bf16.msra.mxu0 0
    %940 = vmatprep.subr.bf16.mxu0 0
    %941 = vmatpush1.bf16.msra.mxu0 0
    %942 = vmatprep.subr.bf16.mxu0 0
    %943 = vmatpush1.bf16.msra.mxu0 0
    %944 = vmatprep.subr.bf16.mxu0 0
    %945 = vmatpush1.bf16.msra.mxu0 0
    %946 = vmatprep.subr.bf16.mxu0 0
    %947 = vmatpush1.bf16.msra.mxu0 0
    %948 = vmatprep.mubr.bf16.mxu0 0
    %949 = vmatmul.mubr.bf16.gmra.mrb[0].mxu0 %v843
    %v950 = vpop.f32.mrb[0].mxu0
    %v951 = vadd.f32 %v866, %v950
    %v952 = vpop.f32.mrb[0].mxu0
    %v953 = vpop.f32.mrb[0].mxu0
    %v954 = vadd.f32 %v866, %v953
    %v955 = vpop.f32.mrb[0].mxu0
    %956 = vmatprep.mubr.bf16.mxu0 0
    %957 = vmatmul.mubr.bf16.gmra.mrb[0].mxu0 %v844
    %v958 = vpop.f32.mrb[0].mxu0
    %v959 = vadd.f32 %v866, %v958
    %v960 = vpop.f32.mrb[0].mxu0
    %v961 = vpop.f32.mrb[0].mxu0
    %v962 = vadd.f32 %v866, %v961
    %v963 = vpop.f32.mrb[0].mxu0
    %964 = vdwg.mxu0
    %965 = vst [vmem:[#allocation11] sm:$0xff] %v951
    %966 = vst [vmem:[#allocation11 + $0x8] sm:$0xff] %v954
    %967 = vst [vmem:[#allocation11 + $0x10] sm:$0xff] %v959
    %968 = vst [vmem:[#allocation11 + $0x18] sm:$0xff] %v962
    // Predicated region
    $region50: #{tpu_custom_call.1} parent=1 // pred_check
      _
    $region51: #{tpu_custom_call.1} parent=1 // pred_check_branch
      %970 = sbr.rel (0) target = $region53
    $region52: #{tpu_custom_call.1} parent=1 // pred_region
      %s972 = ssub.s32 512, 512
      %973 = vsyncadd [#allocation4], %s972
      %s974 = sshll.u32 [#allocation11], 4
      %s975 = int_to_ptr.vmem [resolvable:$true] %s974
      %980 = dma.vmem_to_hbm [thread:$0]  %s975, 512, %s7, [#allocation4], 128, 128, 8
    $region53: #{tpu_custom_call.1} parent=1 // pred_fallthru
      _
    // Predicated region
    $region54: #{tpu_custom_call.1} parent=1 // pred_check
      _
    $region55: #{tpu_custom_call.1} parent=1 // pred_check_branch
      %982 = sbr.rel (0) target = $region57
    $region56: #{tpu_custom_call.1} parent=1 // pred_region
      %983 = dma.done [#allocation4], 512
    $region57: #{tpu_custom_call.1} parent=1 // pred_fallthru
      _
    %984 = vsyncpa [#allocation3], 1
    %985 = vsyncpa [#allocation6], 1
    %986 = vsyncpa [#allocation9], 1
    %987 = vsyncpa [#allocation4], 1

</llo_original>
